<compile_context>
chip_gen: v7x
topology: tpu7x:2x2x1
jax: 0.10.0
libtpu: 0.0.40
codegen_flags: <defaults>
</compile_context>

<pallas_src>
import jax
import jax.numpy as jnp
from jax import lax
from jax.experimental import pallas as pl
from jax.experimental.pallas import tpu as pltpu


def _round_up(x, m):
    return ((x + m - 1) // m) * m


def _logits_lse_kernel(x_ref, w_ref, b_ref, logits_ref, lse_ref, m_sc, l_sc):
    """Pass 1: logits = x @ W^T + b for one (tm, tn) tile + online LSE over V."""
    j = pl.program_id(1)

    @pl.when(j == 0)
    def _():
        m_sc[...] = jnp.full_like(m_sc, -jnp.inf)
        l_sc[...] = jnp.zeros_like(l_sc)

    x = x_ref[...].astype(jnp.bfloat16)            # (tm, D)
    w = w_ref[...]                                 # (tn, D) bf16, un-transposed
    # Contract on D (dim 1 of both operands) -> (tm, tn), f32 accumulation.
    logits = lax.dot_general(
        x, w, (((1,), (1,)), ((), ())),
        preferred_element_type=jnp.float32)
    logits = logits + b_ref[...]                   # f32 bias (padded cols = -1e30)
    logits_ref[...] = logits

    # Online log-sum-exp over the V grid axis.
    m_prev = m_sc[...]
    m_new = jnp.maximum(m_prev, jnp.max(logits, axis=-1, keepdims=True))
    l_sc[...] = (l_sc[...] * jnp.exp(m_prev - m_new)
                 + jnp.sum(jnp.exp(logits - m_new), axis=-1, keepdims=True))
    m_sc[...] = m_new

    @pl.when(j == pl.num_programs(1) - 1)
    def _():
        lse_ref[...] = m_sc[...] + jnp.log(l_sc[...])


def _normalize_kernel(logits_ref, lse_ref, out_ref):
    """Pass 2: log_softmax = logits - lse (lse broadcast over the V tile)."""
    out_ref[...] = logits_ref[...] - lse_ref[...]


def cbow_forward(inputs, embedding_table, linear_weight, linear_bias,
                 *, tm=None, tn=None):
    """CBOW forward.

    inputs:          (B, C) int32 indices
    embedding_table: (V, D) float32
    linear_weight:   (V, D) float32  (PyTorch nn.Linear convention)
    linear_bias:     (V,)   float32
    returns:         (B, V) float32 log-probabilities
    """
    B, C = inputs.shape
    V, D = embedding_table.shape

    # ---- JAX glue: embedding gather + context sum (tiny vs the W stream) ----
    summed = jnp.take(embedding_table, inputs, axis=0).sum(axis=-2)   # (B, D) f32

    # ---- Tiling (re-derive conservatively; fits v7x's 64 MiB VMEM too) ----
    if tm is None:
        tm = min(128, _round_up(B, 8))
    if tn is None:
        tn = min(512, _round_up(V, 128))
    B_pad = _round_up(B, tm)
    V_pad = _round_up(V, tn)      # lane-dense: multiple of 128 (tn is)
    nb, nv = B_pad // tm, V_pad // tn

    # ---- Padding / dtype prep ----
    x = jnp.zeros((B_pad, D), jnp.float32).at[:B].set(summed)
    w = jnp.zeros((V_pad, D), jnp.bfloat16).at[:V].set(
        linear_weight.astype(jnp.bfloat16))
    # Padded vocab columns get -1e30 bias so exp() kills them in the LSE.
    b = jnp.full((1, V_pad), -1e30, jnp.float32).at[0, :V].set(linear_bias)

    logits, lse = pl.pallas_call(
        _logits_lse_kernel,
        out_shape=(jax.ShapeDtypeStruct((B_pad, V_pad), jnp.float32),
                   jax.ShapeDtypeStruct((B_pad, 1), jnp.float32)),
        grid_spec=pltpu.PrefetchScalarGridSpec(
            num_scalar_prefetch=0,
            grid=(nb, nv),
            in_specs=[
                pl.BlockSpec((tm, D), lambda i, j: (i, 0)),   # summed activations
                pl.BlockSpec((tn, D), lambda i, j: (j, 0)),   # streamed bf16 weight
                pl.BlockSpec((1, tn), lambda i, j: (0, j)),   # bias tile
            ],
            out_specs=[
                pl.BlockSpec((tm, tn), lambda i, j: (i, j)),  # logits tile
                pl.BlockSpec((tm, 1), lambda i, j: (i, 0)),   # per-row LSE (resident over j)
            ],
            scratch_shapes=[pltpu.VMEM((tm, 1), jnp.float32),   # running max
                            pltpu.VMEM((tm, 1), jnp.float32)],  # running sum-exp
        ),
        compiler_params=pltpu.CompilerParams(
            dimension_semantics=("parallel", "arbitrary")),
    )(x, w, b)

    out = pl.pallas_call(
        _normalize_kernel,
        out_shape=jax.ShapeDtypeStruct((B_pad, V_pad), jnp.float32),
        grid=(nb, nv),
        in_specs=[
            pl.BlockSpec((tm, tn), lambda i, j: (i, j)),
            pl.BlockSpec((tm, 1), lambda i, j: (i, 0)),
        ],
        out_specs=pl.BlockSpec((tm, tn), lambda i, j: (i, j)),
        compiler_params=pltpu.CompilerParams(
            dimension_semantics=("parallel", "parallel")),
    )(logits, lse)

    return out[:B, :V]


def cbow_reference(inputs, embedding_table, linear_weight, linear_bias,
                   compute_dtype=jnp.float32):
    summed = embedding_table[inputs].sum(axis=-2)                  # (B, D)
    logits = jnp.dot(summed.astype(compute_dtype),
                     linear_weight.T.astype(compute_dtype),
                     preferred_element_type=jnp.float32) + linear_bias
    return jax.nn.log_softmax(logits, axis=-1)


if __name__ == "__main__":
    # Small shapes consistent with the module.
    vocab_size = 64
    embedding_dim = 32
    context_size = 4
    batch = 8

    key = jax.random.PRNGKey(0)
    k_emb, k_w, k_b, k_idx = jax.random.split(key, 4)

    embedding_table = jax.random.normal(
        k_emb, (vocab_size, embedding_dim), dtype=jnp.float32)
    bound = 1.0 / (embedding_dim ** 0.5)
    linear_weight = jax.random.uniform(
        k_w, (vocab_size, embedding_dim), dtype=jnp.float32,
        minval=-bound, maxval=bound)
    linear_bias = jax.random.uniform(
        k_b, (vocab_size,), dtype=jnp.float32, minval=-bound, maxval=bound)

    inputs = jax.random.randint(
        k_idx, (batch, context_size), 0, vocab_size, dtype=jnp.int32)

    out = cbow_forward(inputs, embedding_table, linear_weight, linear_bias)
    out = jax.block_until_ready(out)
    assert out.shape == (batch, vocab_size)

    # Match against a reference using the same bf16 matmul precision (tight),
    # and against the full-f32 module semantics (loose, bf16 rounding only).
    ref_bf16 = cbow_reference(inputs, embedding_table, linear_weight,
                              linear_bias, compute_dtype=jnp.bfloat16)
    ref_f32 = cbow_reference(inputs, embedding_table, linear_weight,
                             linear_bias, compute_dtype=jnp.float32)
    assert jnp.allclose(out, ref_bf16, atol=1e-3, rtol=1e-3)
    assert jnp.allclose(out, ref_f32, atol=1e-1, rtol=1e-1)

    print("KERNEL_OK")
</pallas_src>

<mosaic_0001>
module attributes {stable_mosaic.version = 11 : i64} {
  func.func @_logits_lse_kernel(%arg0: i32, %arg1: i32, %arg2: memref<8x32xf32, #tpu.memory_space<vmem>>, %arg3: memref<128x32xbf16, #tpu.memory_space<vmem>>, %arg4: memref<1x128xf32, #tpu.memory_space<vmem>>, %arg5: memref<8x128xf32, #tpu.memory_space<vmem>>, %arg6: memref<8x1xf32, #tpu.memory_space<vmem>>, %arg7: memref<8x1xf32, #tpu.memory_space<vmem>>, %arg8: memref<8x1xf32, #tpu.memory_space<vmem>>) attributes {dimension_semantics = [#tpu.dimension_semantics<parallel>, #tpu.dimension_semantics<arbitrary>], iteration_bounds = array<i64: 1, 1>, scalar_prefetch = 0 : i64, scratch_operands = 2 : i64, tpu.core_type = #tpu.core_type<tc>, window_params = [{transform_indices = @transform_0, window_bounds = array<i64: 8, 32>}, {transform_indices = @transform_1, window_bounds = array<i64: 128, 32>}, {transform_indices = @transform_2, window_bounds = array<i64: 1, 128>}, {transform_indices = @transform_3, window_bounds = array<i64: 8, 128>}, {transform_indices = @transform_4, window_bounds = array<i64: 8, 1>}]} {
    %c0_i32 = arith.constant 0 : i32
    %0 = arith.cmpi eq, %arg1, %c0_i32 : i32
    %1 = arith.extui %0 : i1 to i32
    %c0_i32_0 = arith.constant 0 : i32
    %2 = arith.cmpi ne, %1, %c0_i32_0 : i32
    scf.if %2 {
      %cst_20 = arith.constant 0xFF800000 : f32
      %30 = vector.broadcast %cst_20 : f32 to vector<8x1xf32>
      %c0_21 = arith.constant 0 : index
      %c0_22 = arith.constant 0 : index
      %31 = vector.load %arg7[%c0_21, %c0_22] : memref<8x1xf32, #tpu.memory_space<vmem>>, vector<8x1xf32>
      tpu.vector_store %arg7[%c0_21, %c0_22], %30 {strides = array<i32>} : memref<8x1xf32, #tpu.memory_space<vmem>>, vector<8x1xf32>,
      %cst_23 = arith.constant 0.000000e+00 : f32
      %32 = vector.broadcast %cst_23 : f32 to vector<8x1xf32>
      %c0_24 = arith.constant 0 : index
      %c0_25 = arith.constant 0 : index
      %33 = vector.load %arg8[%c0_24, %c0_25] : memref<8x1xf32, #tpu.memory_space<vmem>>, vector<8x1xf32>
      tpu.vector_store %arg8[%c0_24, %c0_25], %32 {strides = array<i32>} : memref<8x1xf32, #tpu.memory_space<vmem>>, vector<8x1xf32>,
    } else {
    }
    %c0 = arith.constant 0 : index
    %c0_1 = arith.constant 0 : index
    %3 = vector.load %arg2[%c0, %c0_1] : memref<8x32xf32, #tpu.memory_space<vmem>>, vector<8x32xf32>
    %4 = arith.truncf %3 : vector<8x32xf32> to vector<8x32xbf16>
    %c0_2 = arith.constant 0 : index
    %c0_3 = arith.constant 0 : index
    %5 = vector.load %arg3[%c0_2, %c0_3] : memref<128x32xbf16, #tpu.memory_space<vmem>>, vector<128x32xbf16>
    %cst = arith.constant dense<0.000000e+00> : vector<8x128xf32>
    %6 = tpu.matmul %4, %5, %cst {dimension_numbers = #tpu.dot_dimension_numbers<[1], [1], [0], [0], [0, 0, 1, 0], [], []>} : vector<8x32xbf16>, vector<128x32xbf16>, vector<8x128xf32> -> vector<8x128xf32>
    %c0_4 = arith.constant 0 : index
    %c0_5 = arith.constant 0 : index
    %7 = vector.load %arg4[%c0_4, %c0_5] : memref<1x128xf32, #tpu.memory_space<vmem>>, vector<1x128xf32>
    %8 = vector.broadcast %7 : vector<1x128xf32> to vector<8x128xf32>
    %9 = arith.addf %6, %8 : vector<8x128xf32>
    %c0_6 = arith.constant 0 : index
    %c0_7 = arith.constant 0 : index
    %10 = vector.load %arg5[%c0_6, %c0_7] : memref<8x128xf32, #tpu.memory_space<vmem>>, vector<8x128xf32>
    tpu.vector_store %arg5[%c0_6, %c0_7], %9 {strides = array<i32>} : memref<8x128xf32, #tpu.memory_space<vmem>>, vector<8x128xf32>,
    %c0_8 = arith.constant 0 : index
    %c0_9 = arith.constant 0 : index
    %11 = vector.load %arg7[%c0_8, %c0_9] : memref<8x1xf32, #tpu.memory_space<vmem>>, vector<8x1xf32>
    %cst_10 = arith.constant dense<0xFF800000> : vector<8xf32>
    %12 = vector.multi_reduction <maximumf>, %9, %cst_10 [1] : vector<8x128xf32> to vector<8xf32>
    %13 = vector.shape_cast %12 : vector<8xf32> to vector<8x1xf32>
    %14 = arith.maximumf %11, %13 : vector<8x1xf32>
    %c0_11 = arith.constant 0 : index
    %c0_12 = arith.constant 0 : index
    %15 = vector.load %arg8[%c0_11, %c0_12] : memref<8x1xf32, #tpu.memory_space<vmem>>, vector<8x1xf32>
    %16 = arith.subf %11, %14 : vector<8x1xf32>
    %17 = math.exp %16 : vector<8x1xf32>
    %18 = arith.mulf %15, %17 : vector<8x1xf32>
    %19 = vector.broadcast %14 : vector<8x1xf32> to vector<8x128xf32>
    %20 = arith.subf %9, %19 : vector<8x128xf32>
    %21 = math.exp %20 : vector<8x128xf32>
    %cst_13 = arith.constant dense<0.000000e+00> : vector<8xf32>
    %22 = vector.multi_reduction <add>, %21, %cst_13 [1] : vector<8x128xf32> to vector<8xf32>
    %23 = vector.shape_cast %22 : vector<8xf32> to vector<8x1xf32>
    %24 = arith.addf %18, %23 : vector<8x1xf32>
    %c0_14 = arith.constant 0 : index
    %c0_15 = arith.constant 0 : index
    %25 = vector.load %arg8[%c0_14, %c0_15] : memref<8x1xf32, #tpu.memory_space<vmem>>, vector<8x1xf32>
    tpu.vector_store %arg8[%c0_14, %c0_15], %24 {strides = array<i32>} : memref<8x1xf32, #tpu.memory_space<vmem>>, vector<8x1xf32>,
    %c0_16 = arith.constant 0 : index
    %c0_17 = arith.constant 0 : index
    %26 = vector.load %arg7[%c0_16, %c0_17] : memref<8x1xf32, #tpu.memory_space<vmem>>, vector<8x1xf32>
    tpu.vector_store %arg7[%c0_16, %c0_17], %14 {strides = array<i32>} : memref<8x1xf32, #tpu.memory_space<vmem>>, vector<8x1xf32>,
    %c0_i32_18 = arith.constant 0 : i32
    %27 = arith.cmpi eq, %arg1, %c0_i32_18 : i32
    %28 = arith.extui %27 : i1 to i32
    %c0_i32_19 = arith.constant 0 : i32
    %29 = arith.cmpi ne, %28, %c0_i32_19 : i32
    scf.if %29 {
      %c0_20 = arith.constant 0 : index
      %c0_21 = arith.constant 0 : index
      %30 = vector.load %arg7[%c0_20, %c0_21] : memref<8x1xf32, #tpu.memory_space<vmem>>, vector<8x1xf32>
      %c0_22 = arith.constant 0 : index
      %c0_23 = arith.constant 0 : index
      %31 = vector.load %arg8[%c0_22, %c0_23] : memref<8x1xf32, #tpu.memory_space<vmem>>, vector<8x1xf32>
      %32 = math.log %31 : vector<8x1xf32>
      %33 = arith.addf %30, %32 : vector<8x1xf32>
      %c0_24 = arith.constant 0 : index
      %c0_25 = arith.constant 0 : index
      %34 = vector.load %arg6[%c0_24, %c0_25] : memref<8x1xf32, #tpu.memory_space<vmem>>, vector<8x1xf32>
      tpu.vector_store %arg6[%c0_24, %c0_25], %33 {strides = array<i32>} : memref<8x1xf32, #tpu.memory_space<vmem>>, vector<8x1xf32>,
    } else {
    }
    return
  }
  func.func @transform_0(%arg0: i32, %arg1: i32) -> (i32, i32) {
    %c0_i32 = arith.constant 0 : i32
    %c0_i32_0 = arith.constant 0 : i32
    return %arg0, %c0_i32 : i32, i32
  }
  func.func @transform_1(%arg0: i32, %arg1: i32) -> (i32, i32) {
    %c0_i32 = arith.constant 0 : i32
    %c0_i32_0 = arith.constant 0 : i32
    return %arg1, %c0_i32 : i32, i32
  }
  func.func @transform_2(%arg0: i32, %arg1: i32) -> (i32, i32) {
    %c0_i32 = arith.constant 0 : i32
    %c0_i32_0 = arith.constant 0 : i32
    return %c0_i32, %arg1 : i32, i32
  }
  func.func @transform_3(%arg0: i32, %arg1: i32) -> (i32, i32) {
    %c0_i32 = arith.constant 0 : i32
    return %arg0, %arg1 : i32, i32
  }
  func.func @transform_4(%arg0: i32, %arg1: i32) -> (i32, i32) {
    %c0_i32 = arith.constant 0 : i32
    %c0_i32_0 = arith.constant 0 : i32
    return %arg0, %c0_i32 : i32, i32
  }
}

</mosaic_0001>

<llo_original>
// kernel: tpu_custom_call.1
$region0: #{tpu_custom_call.1}
  #allocation0 [shape = 'u32[]', space=smem, size = 0x4, offset = 0x4, fixed_abs, tag = 'smem constant byte address 0x4 - core index']
  #allocation1 [shape = 'u32[144,128]{1,0:T(1,128)}', space=vmem, size = 0x12000, scoped, tag = 'internal scratch']
  #allocation2 [shape = 'f32[8,1]{1,0:T(8,128)}', space=vmem, size = 0x1000, scoped, tag = 'scratch operand']
  #allocation3 [shape = 'f32[8,1]{1,0:T(8,128)}', space=vmem, size = 0x1000, scoped, tag = 'scratch operand']
  %s0 = inlined_call_operand.vmem [shape: f32[8,32], index: 0, kind: input, shape index: {}]
  %s1 = inlined_call_operand.vmem [shape: bf16[128,32], index: 1, kind: input, shape index: {}]
  %s2 = inlined_call_operand.vmem [shape: f32[1,128], index: 2, kind: input, shape index: {}]
  %s3 = inlined_call_operand.hbm [shape: f32[8,128], index: 3, kind: output, shape index: {0}]
  %s4 = inlined_call_operand.vmem [shape: f32[8,1], index: 4, kind: output, shape index: {1}]
  %5 = xla_tuple %s3, %s4
  %s6 = sld [smem:[#allocation0]]
  $region38: #{tpu_custom_call.1} parent=0
    _
  %s8 = ssub.s32 1, %s6
  %s9 = scalar_select 0, %s8, %s6
  $region1: #{tpu_custom_call.1} parent=0
    #allocation4 [shape = 'u8[4096]{0}', space=vmem, size = 0x1000, scoped, tag = 'output window, operand 0, single buffered']
    #allocation5 [shape = 's32[1]{0}', space=sflag, size = 0x4, scoped, tag = 'scoped memory for tpu_custom_call.1']
    %10 = vsyncpa [#allocation5], 0
    // Predicated region
    $region2: #{tpu_custom_call.1} parent=1 // pred_check
      _
    $region3: #{tpu_custom_call.1} parent=1 // pred_check_branch
      %12 = sbr.rel (0) target = $region5
    $region4: #{tpu_custom_call.1} parent=1 // pred_region
      _
    $region5: #{tpu_custom_call.1} parent=1 // pred_fallthru
      _
    // Predicated region
    $region6: #{tpu_custom_call.1} parent=1 // pred_check
      _
    $region7: #{tpu_custom_call.1} parent=1 // pred_check_branch
      %14 = sbr.rel (0) target = $region9
    $region8: #{tpu_custom_call.1} parent=1 // pred_region
      _
    $region9: #{tpu_custom_call.1} parent=1 // pred_fallthru
      _
    // Predicated region
    $region10: #{tpu_custom_call.1} parent=1 // pred_check
      _
    $region11: #{tpu_custom_call.1} parent=1 // pred_check_branch
      %16 = sbr.rel (0) target = $region13
    $region12: #{tpu_custom_call.1} parent=1 // pred_region
      _
    $region13: #{tpu_custom_call.1} parent=1 // pred_fallthru
      _
    %p18 = scmp.eq.s32.totalorder 0, 0
    // Predicated region
    $region14: #{tpu_custom_call.1} parent=1 // pred_check
      %p19 = pneg %p18
    $region15: #{tpu_custom_call.1} parent=1 // pred_check_branch
      %21 = sbr.rel (%p19) target = $region17
    $region16: #{tpu_custom_call.1} parent=1 // pred_region
      %vm22 = vcmask 7168
      %23 = vst.msk [vmem:[#allocation2] sm:$0xff] %vm22, -inf
      %24 = vst.msk [vmem:[#allocation3] sm:$0xff] %vm22, 0.0
    $region17: #{tpu_custom_call.1} parent=1 // pred_fallthru
      _
    %v25 = vld [vmem:[%s0] sm:$0xff]
    %v26 = vpack.c.bf16 %v25, %v25
    %v27 = vld [vmem:[%s1] sm:$0xf]
    %v28 = vld [vmem:[%s1 + $0x4] sm:$0xf]
    %v29 = vld [vmem:[%s1 + $0x8] sm:$0xf]
    %v30 = vld [vmem:[%s1 + $0xc] sm:$0xf]
    %v31 = vld [vmem:[%s1 + $0x10] sm:$0xf]
    %v32 = vld [vmem:[%s1 + $0x14] sm:$0xf]
    %v33 = vld [vmem:[%s1 + $0x18] sm:$0xf]
    %v34 = vld [vmem:[%s1 + $0x1c] sm:$0xf]
    %v35 = vld [vmem:[%s1 + $0x20] sm:$0xf]
    %v36 = vld [vmem:[%s1 + $0x24] sm:$0xf]
    %v37 = vld [vmem:[%s1 + $0x28] sm:$0xf]
    %v38 = vld [vmem:[%s1 + $0x2c] sm:$0xf]
    %v39 = vld [vmem:[%s1 + $0x30] sm:$0xf]
    %v40 = vld [vmem:[%s1 + $0x34] sm:$0xf]
    %v41 = vld [vmem:[%s1 + $0x38] sm:$0xf]
    %v42 = vld [vmem:[%s1 + $0x3c] sm:$0xf]
    %v43 = vld [vmem:[%s2] sm:$0x1]
    %v45 = vlaneseq
    %v46 = vshrl.u32 %v45, 7
    %v47 = vsub.s32 0, %v46
    %v48 = vrot.slane %v43, %v47
    %v66 = vunpack.c.l.b16 %v27
    %v67 = vunpack.c.l.b16 %v28
    %v68 = vunpack.c.l.b16 %v29
    %v69 = vunpack.c.l.b16 %v30
    %v70 = vunpack.c.l.b16 %v31
    %v71 = vunpack.c.l.b16 %v32
    %v72 = vunpack.c.l.b16 %v33
    %v73 = vunpack.c.l.b16 %v34
    %v74 = vunpack.c.l.b16 %v35
    %v75 = vunpack.c.l.b16 %v36
    %v76 = vunpack.c.l.b16 %v37
    %v77 = vunpack.c.l.b16 %v38
    %v78 = vunpack.c.l.b16 %v39
    %v79 = vunpack.c.l.b16 %v40
    %v80 = vunpack.c.l.b16 %v41
    %v81 = vunpack.c.l.b16 %v42
    %v82 = vpack.c.b16 %v67, %v66
    %v83 = vpack.c.b16 %v69, %v68
    %v84 = vpack.c.b16 %v71, %v70
    %v85 = vpack.c.b16 %v73, %v72
    %v86 = vpack.c.b16 %v75, %v74
    %v87 = vpack.c.b16 %v77, %v76
    %v88 = vpack.c.b16 %v79, %v78
    %v89 = vpack.c.b16 %v81, %v80
    %vm90 = vcmask 261120
    %v92 = vsel %vm90, %v26, 0
    %v95 = vsel %vm90, %v82, 0
    %v98 = vsel %vm90, %v83, 0
    %v101 = vsel %vm90, %v84, 0
    %v104 = vsel %vm90, %v85, 0
    %v107 = vsel %vm90, %v86, 0
    %v110 = vsel %vm90, %v87, 0
    %v113 = vsel %vm90, %v88, 0
    %v116 = vsel %vm90, %v89, 0
    %118 = vmatprep.subr.bf16.mxu0 0
    %119 = vmatpush1.bf16.xpose.msra.mxu0 %v95
    %120 = vmatprep.subr.bf16.mxu0 0
    %121 = vmatpush1.bf16.xpose.msra.mxu0 %v98
    %122 = vmatprep.subr.bf16.mxu0 0
    %123 = vmatpush1.bf16.xpose.msra.mxu0 %v101
    %124 = vmatprep.subr.bf16.mxu0 0
    %125 = vmatpush1.bf16.xpose.msra.mxu0 %v104
    %126 = vmatprep.subr.bf16.mxu0 0
    %127 = vmatpush1.bf16.xpose.msra.mxu0 %v107
    %128 = vmatprep.subr.bf16.mxu0 0
    %129 = vmatpush1.bf16.xpose.msra.mxu0 %v110
    %130 = vmatprep.subr.bf16.mxu0 0
    %131 = vmatpush1.bf16.xpose.msra.mxu0 %v113
    %132 = vmatprep.subr.bf16.mxu0 0
    %133 = vmatpush1.bf16.xpose.msra.mxu0 %v116
    %134 = vmatprep.subr.bf16.mxu0 0
    %135 = vmatpush1.bf16.xpose.msra.mxu0 0
    %136 = vmatprep.subr.bf16.mxu0 0
    %137 = vmatpush1.bf16.xpose.msra.mxu0 0
    %138 = vmatprep.subr.bf16.mxu0 0
    %139 = vmatpush1.bf16.xpose.msra.mxu0 0
    %140 = vmatprep.subr.bf16.mxu0 0
    %141 = vmatpush1.bf16.xpose.msra.mxu0 0
    %142 = vmatprep.subr.bf16.mxu0 0
    %143 = vmatpush1.bf16.xpose.msra.mxu0 0
    %144 = vmatprep.subr.bf16.mxu0 0
    %145 = vmatpush1.bf16.xpose.msra.mxu0 0
    %146 = vmatprep.subr.bf16.mxu0 0
    %147 = vmatpush1.bf16.xpose.msra.mxu0 0
    %148 = vmatprep.subr.bf16.mxu0 0
    %149 = vmatpush1.bf16.xpose.msra.mxu0 0
    %150 = vmatprep.mubr.bf16.mxu0 0
    %151 = vmatmul.mubr.bf16.gmra.mrb[0].mxu0 %v92
    %v152 = vpop.f32.mrb[0].mxu0
    %v153 = vadd.f32 %v48, %v152
    %v154 = vpop.f32.mrb[0].mxu0
    %v155 = vpop.f32.mrb[0].mxu0
    %v156 = vpop.f32.mrb[0].mxu0
    %157 = vdwg.mxu0
    %158 = vst [vmem:[#allocation4] sm:$0xff] %v153
    %v159 = vld [vmem:[#allocation2] sm:$0xff]
    %160 = vmax.xlane.f32.xlu0 %v153
    %v161 = vpop.xlane.xlu0 %160
    %v162 = vmax.f32 %v159, %v161
    %v163 = vld [vmem:[#allocation3] sm:$0xff]
    %v164 = vsub.f32 %v159, %v162
    %v165 = vmul.f32 %v164, 1.442695
    %v166 = vpow.pop %v165
    %v167 = vmul.f32 %v163, %v166
    %169 = vset.pattern.permute.xlu0 0
    %170 = vperm.xlu0 %169, %v162
    %v171 = vpop.permute.xlu0 %170
    %v173 = vsub.f32 %v153, %v171
    %v174 = vmul.f32 %v173, 1.442695
    %v175 = vpow.pop %v174
    %176 = vadd.xlane.f32.xlu0 %v175
    %v177 = vpop.xlane.xlu0 %176
    %v178 = vadd.f32 %v167, %v177
    %vm179 = vcmask 7168
    %180 = vst.msk [vmem:[#allocation3] sm:$0xff] %vm179, %v178
    %181 = vst.msk [vmem:[#allocation2] sm:$0xff] %vm179, %v162
    // Predicated region
    $region18: #{tpu_custom_call.1} parent=1 // pred_check
      %p182 = pneg %p18
    $region19: #{tpu_custom_call.1} parent=1 // pred_check_branch
      %184 = sbr.rel (%p182) target = $region21
    $region20: #{tpu_custom_call.1} parent=1 // pred_region
      %v185 = vld [vmem:[#allocation2] sm:$0xff]
      %v186 = vld [vmem:[#allocation3] sm:$0xff]
      %v187 = vlog2.pop %v186
      %v188 = vmul.f32 %v187, 0.6931472
      %v189 = vadd.f32 %v185, %v188
      %190 = vst.msk [vmem:[%s4] sm:$0xff] %vm179, %v189
    $region21: #{tpu_custom_call.1} parent=1 // pred_fallthru
      _
    // Predicated region
    $region22: #{tpu_custom_call.1} parent=1 // pred_check
      _
    $region23: #{tpu_custom_call.1} parent=1 // pred_check_branch
      %192 = sbr.rel (0) target = $region25
    $region24: #{tpu_custom_call.1} parent=1 // pred_region
      %s194 = ssub.s32 128, 128
      %195 = vsyncadd [#allocation5], %s194
      %s197 = sshll.u32 [#allocation4], 4
      %s198 = int_to_ptr.vmem [resolvable:$true] %s197
      %200 = dma.vmem_to_hbm [thread:$0]  %s198, 128, %s3, [#allocation5]
    $region25: #{tpu_custom_call.1} parent=1 // pred_fallthru
      _
    // Predicated region
    $region26: #{tpu_custom_call.1} parent=1 // pred_check
      _
    $region27: #{tpu_custom_call.1} parent=1 // pred_check_branch
      %202 = sbr.rel (0) target = $region29
    $region28: #{tpu_custom_call.1} parent=1 // pred_region
      _
    $region29: #{tpu_custom_call.1} parent=1 // pred_fallthru
      _
    // Predicated region
    $region30: #{tpu_custom_call.1} parent=1 // pred_check
      _
    $region31: #{tpu_custom_call.1} parent=1 // pred_check_branch
      %204 = sbr.rel (0) target = $region33
    $region32: #{tpu_custom_call.1} parent=1 // pred_region
      %205 = dma.done [#allocation5], 128
    $region33: #{tpu_custom_call.1} parent=1 // pred_fallthru
      _
    // Predicated region
    $region34: #{tpu_custom_call.1} parent=1 // pred_check
      _
    $region35: #{tpu_custom_call.1} parent=1 // pred_check_branch
      %207 = sbr.rel (0) target = $region37
    $region36: #{tpu_custom_call.1} parent=1 // pred_region
      _
    $region37: #{tpu_custom_call.1} parent=1 // pred_fallthru
      _
    %208 = vsyncpa [#allocation5], 1

</llo_original>
